<compile_context>
chip_gen: v5e
topology: v5e:2x2
jax: 0.10.0
libtpu: 0.0.40
codegen_flags: <defaults>
</compile_context>

<pallas_src>
import jax
import jax.numpy as jnp
from jax.experimental import pallas as pl
from jax.experimental.pallas import tpu as pltpu


def _round_up(n, m):
    return ((n + m - 1) // m) * m


def _cdiv(a, b):
    return (a + b - 1) // b


def classifier_kernel(x_ref, w1t_ref, b1_ref, w2_ref, b2_ref, out_ref):
    """One batch tile: x (TB, D) f32 -> probabilities (1, TB) lane-dense row."""
    x = x_ref[...]                                           # (TB, D) f32

    # fc1 with both BatchNorms folded in by the wrapper.  Computed transposed:
    # h^T = W1'(H,D) contracted with x(TB,D) over D -> (H, TB), the MXU-native
    # "Q @ K^T" contraction, so the batch dimension ends up on LANES.
    h = jax.lax.dot_general(
        w1t_ref[...], x,
        dimension_numbers=(((1,), (1,)), ((), ())),
        preferred_element_type=jnp.float32,
        precision=jax.lax.Precision.HIGHEST)                 # (H, TB) f32

    # Bias + (eval-mode dropout = identity) + ReLU.
    h = jnp.maximum(h + b1_ref[...], 0.0)                    # (H, TB)

    # fc2 (64 -> 1) as a (1,H) x (H,TB) matmul: produces the lane-dense (1, TB)
    # logit row directly (no per-row masked column stores, no h*w2 vmul pass).
    logit = jnp.dot(w2_ref[...], h,
                    preferred_element_type=jnp.float32,
                    precision=jax.lax.Precision.HIGHEST) + b2_ref[0]   # (1, TB)

    # Sigmoid: exp on the EUP, exact divide (VALU has slack; approx vrcp would
    # only cost accuracy).  exp(-logit) -> inf correctly yields 0.
    out_ref[...] = 1.0 / (1.0 + jnp.exp(-logit))


def _choose_tiling(B, D, H, tile_b):
    """Adaptive batch tile: as big as VMEM allows, minimal padding, even grid."""
    # Per-row VMEM footprint: double-buffered f32 x tile + f32 h^T intermediate
    # + double-buffered output row.  12 MiB budget stays under v5e's 16 MiB
    # default scoped VMEM (v6e/v7x default to 32 MiB), so no vmem_limit needed.
    vmem_budget = 12 * 1024 * 1024
    per_row = 2 * D * 4 + H * 4 + 2 * 4
    max_rows = max(8, min(tile_b, vmem_budget // per_row))

    num_tiles = max(1, _cdiv(B, max_rows))
    # Keep the grid length even when there is enough work so the "parallel"
    # grid axis can shard the batch across both TensorCores on v7x
    # (v5e/v6e have one TC; the extra step costs ~0.35 us, negligible).
    if num_tiles % 2 == 1 and B >= 1024:
        num_tiles += 1
    tb = _round_up(_cdiv(B, num_tiles), 8)
    return num_tiles, tb


def classifier_forward(x, params, *, tile_b=8192):
    """x: [B, D] float32; params: dict from make_params (PyTorch-style, unfolded)."""
    B, D = x.shape
    H = params["w1"].shape[1]

    s1, t1 = params["bn1_scale"], params["bn1_shift"]      # (1, D)
    s2, t2 = params["bn2_scale"], params["bn2_shift"]      # (1, H)
    w1, b1 = params["w1"], params["b1"]                    # (D, H), (1, H)
    w2, b2 = params["w2"], params["b2"]                    # (H, 1), (1, 1)

    # Fold bn1 / bn2 into fc1 (exact f32 algebra; done once, outside the kernel).
    w1f = (s1.reshape(D, 1) * w1) * s2                      # (D, H)
    b1f = (t1 @ w1 + b1) * s2 + t2                          # (1, H)
    w1t = jnp.asarray(w1f.T, jnp.float32)                   # (H, D)  resident MXU operand
    b1c = jnp.asarray(b1f.reshape(H, 1), jnp.float32)       # (H, 1)  column bias
    w2r = jnp.asarray(w2.reshape(1, H), jnp.float32)        # (1, H)  fc2 weight row
    b2s = jnp.asarray(b2.reshape(1), jnp.float32)           # (1,)    SMEM scalar

    num_tiles, TB = _choose_tiling(B, D, H, tile_b)
    B_pad = num_tiles * TB
    if B_pad != B:
        x = jnp.pad(x, ((0, B_pad - B), (0, 0)))

    cost = pl.CostEstimate(
        flops=int(2 * B_pad * D * H + 2 * B_pad * H),
        transcendentals=int(B_pad),
        bytes_accessed=int(B_pad * D * 4 + B_pad * 4
                           + (w1t.size + b1c.size + w2r.size + 1) * 4),
    )

    out = pl.pallas_call(
        classifier_kernel,
        # (num_tiles, 1, TB): last two block dims equal the full array dims, and
        # the per-tile probability row is lane-dense (unmasked stores).
        out_shape=jax.ShapeDtypeStruct((num_tiles, 1, TB), jnp.float32),
        grid=(num_tiles,),
        in_specs=[
            pl.BlockSpec((TB, D), lambda i: (i, 0)),             # x: batch-tiled
            pl.BlockSpec((H, D), lambda i: (0, 0)),              # folded fc1 weight (resident)
            pl.BlockSpec((H, 1), lambda i: (0, 0)),              # folded fc1 bias  (resident)
            pl.BlockSpec((1, H), lambda i: (0, 0)),              # fc2 weight row   (resident)
            pl.BlockSpec(memory_space=pltpu.MemorySpace.SMEM),   # fc2 bias scalar
        ],
        out_specs=pl.BlockSpec((None, 1, TB), lambda i: (i, 0, 0)),  # lane-dense row
        compiler_params=pltpu.CompilerParams(
            dimension_semantics=("parallel",)),
        cost_estimate=cost,
    )(x, w1t, b1c, w2r, b2s)

    # (num_tiles, 1, TB) row-major == batch order; drop padded rows.
    return out.reshape(B_pad, 1)[:B]


def make_params(key, hidden_dim1, hidden_dim2):
    """Deterministic synthetic parameters matching the module's __init__ shapes."""
    D = hidden_dim1 + hidden_dim2
    H = 64
    eps = 1e-5
    ks = jax.random.split(key, 12)

    def linear(kw, kb, fan_in, fan_out):
        # PyTorch nn.Linear default init: U(-1/sqrt(fan_in), 1/sqrt(fan_in))
        bound = 1.0 / jnp.sqrt(jnp.float32(fan_in))
        w = jax.random.uniform(kw, (fan_in, fan_out), jnp.float32, -bound, bound)
        b = jax.random.uniform(kb, (1, fan_out), jnp.float32, -bound, bound)
        return w, b

    w1, b1 = linear(ks[0], ks[1], D, H)
    w2, b2 = linear(ks[2], ks[3], H, 1)

    def bn_affine(kg, kb, km, kv, dim):
        gamma = 1.0 + 0.1 * jax.random.normal(kg, (1, dim), jnp.float32)
        beta = 0.1 * jax.random.normal(kb, (1, dim), jnp.float32)
        running_mean = 0.1 * jax.random.normal(km, (1, dim), jnp.float32)
        running_var = 1.0 + 0.1 * jax.random.uniform(kv, (1, dim), jnp.float32)
        scale = gamma / jnp.sqrt(running_var + eps)
        shift = beta - running_mean * scale
        return scale, shift

    bn1_scale, bn1_shift = bn_affine(ks[4], ks[5], ks[6], ks[7], D)
    bn2_scale, bn2_shift = bn_affine(ks[8], ks[9], ks[10], ks[11], H)

    return {
        "bn1_scale": bn1_scale, "bn1_shift": bn1_shift,
        "w1": w1, "b1": b1,
        "bn2_scale": bn2_scale, "bn2_shift": bn2_shift,
        "w2": w2, "b2": b2,
    }


def reference_forward(x, p):
    """Pure-JAX f32 reference following the PyTorch module op-for-op (eval mode)."""
    hp = jax.lax.Precision.HIGHEST
    h = x * p["bn1_scale"] + p["bn1_shift"]                       # batch_norm1 (running stats)
    h = jnp.dot(h, p["w1"], precision=hp) + p["b1"]               # fc1
    h = h * p["bn2_scale"] + p["bn2_shift"]                       # batch_norm2
    h = jnp.maximum(h, 0.0)                                       # dropout (identity) + relu
    h = jnp.dot(h, p["w2"], precision=hp) + p["b2"]               # fc2
    return jax.nn.sigmoid(h)                                      # sigmoid


if __name__ == "__main__":
    hidden_dim1, hidden_dim2 = 16, 16
    D = hidden_dim1 + hidden_dim2

    key = jax.random.PRNGKey(0)
    kx1, kx2, kx3, kp = jax.random.split(key, 4)
    params = make_params(kp, hidden_dim1, hidden_dim2)

    # Small case: single tiny tile, no padding beyond 8-row rounding.
    x_small = jax.random.normal(kx1, (8, D), jnp.float32)
    out_small = jax.block_until_ready(classifier_forward(x_small, params))
    ref_small = reference_forward(x_small, params)
    assert out_small.shape == (8, 1)
    assert jnp.allclose(out_small, ref_small, atol=1e-3, rtol=0.0), "small-batch mismatch"

    # Awkward batch size: adaptive TB -> one 608-row tile (8 padded rows, not 424).
    x_mid = jax.random.normal(kx2, (600, D), jnp.float32)
    ref_mid = reference_forward(x_mid, params)
    out_mid = jax.block_until_ready(classifier_forward(x_mid, params))
    assert out_mid.shape == (600, 1)
    assert jnp.allclose(out_mid, ref_mid, atol=1e-3, rtol=0.0), "adaptive-tile mismatch"

    # Force a multi-step grid (3 tiles of 200 rows): exercises tiling + resident weights.
    out_mid_tiled = jax.block_until_ready(classifier_forward(x_mid, params, tile_b=256))
    assert out_mid_tiled.shape == (600, 1)
    assert jnp.allclose(out_mid_tiled, ref_mid, atol=1e-3, rtol=0.0), "multi-tile mismatch"

    # Large enough batch to trigger the even grid split (2 tiles for v7x megacore).
    x_big = jax.random.normal(kx3, (1536, D), jnp.float32)
    ref_big = reference_forward(x_big, params)
    out_big = jax.block_until_ready(classifier_forward(x_big, params))
    assert out_big.shape == (1536, 1)
    assert jnp.allclose(out_big, ref_big, atol=1e-3, rtol=0.0), "even-split mismatch"

    print("KERNEL_OK")
</pallas_src>

<mosaic_0001>
module attributes {stable_mosaic.version = 11 : i64} {
  func.func @classifier_kernel(%arg0: i32, %arg1: memref<8x32xf32, #tpu.memory_space<vmem>>, %arg2: memref<64x32xf32, #tpu.memory_space<vmem>>, %arg3: memref<64x1xf32, #tpu.memory_space<vmem>>, %arg4: memref<1x64xf32, #tpu.memory_space<vmem>>, %arg5: memref<1xf32, #tpu.memory_space<smem>>, %arg6: memref<1x1x8xf32, #tpu.memory_space<vmem>>) attributes {dimension_semantics = [#tpu.dimension_semantics<parallel>], iteration_bounds = array<i64: 1>, scalar_prefetch = 0 : i64, scratch_operands = 0 : i64, tpu.core_type = #tpu.core_type<tc>, window_params = [{transform_indices = @transform_0, window_bounds = array<i64: 8, 32>}, {pipeline_mode = #tpu.pipeline_mode<synchronous>, transform_indices = @transform_1, window_bounds = array<i64: 64, 32>}, {pipeline_mode = #tpu.pipeline_mode<synchronous>, transform_indices = @transform_2, window_bounds = array<i64: 64, 1>}, {pipeline_mode = #tpu.pipeline_mode<synchronous>, transform_indices = @transform_3, window_bounds = array<i64: 1, 64>}, {transform_indices = @transform_4, window_bounds = array<i64: 1>}, {transform_indices = @transform_5, window_bounds = array<i64: 1, 1, 8>}]} {
    %c0 = arith.constant 0 : index
    %c0_0 = arith.constant 0 : index
    %0 = vector.load %arg1[%c0, %c0_0] : memref<8x32xf32, #tpu.memory_space<vmem>>, vector<8x32xf32>
    %c0_1 = arith.constant 0 : index
    %c0_2 = arith.constant 0 : index
    %1 = vector.load %arg2[%c0_1, %c0_2] : memref<64x32xf32, #tpu.memory_space<vmem>>, vector<64x32xf32>
    %cst = arith.constant dense<0.000000e+00> : vector<64x8xf32>
    %2 = tpu.matmul %1, %0, %cst {dimension_numbers = #tpu.dot_dimension_numbers<[1], [1], [0], [0], [0, 0, 1, 0], [], []>, precision = #tpu.contract_precision<fp32>} : vector<64x32xf32>, vector<8x32xf32>, vector<64x8xf32> -> vector<64x8xf32>
    %c0_3 = arith.constant 0 : index
    %c0_4 = arith.constant 0 : index
    %3 = vector.load %arg3[%c0_3, %c0_4] : memref<64x1xf32, #tpu.memory_space<vmem>>, vector<64x1xf32>
    %4 = vector.broadcast %3 : vector<64x1xf32> to vector<64x8xf32>
    %5 = arith.addf %2, %4 : vector<64x8xf32>
    %cst_5 = arith.constant 0.000000e+00 : f32
    %6 = vector.broadcast %cst_5 : f32 to vector<64x8xf32>
    %7 = arith.maximumf %5, %6 : vector<64x8xf32>
    %c0_6 = arith.constant 0 : index
    %c0_7 = arith.constant 0 : index
    %8 = vector.load %arg4[%c0_6, %c0_7] : memref<1x64xf32, #tpu.memory_space<vmem>>, vector<1x64xf32>
    %cst_8 = arith.constant dense<0.000000e+00> : vector<1x8xf32>
    %9 = tpu.matmul %8, %7, %cst_8 {dimension_numbers = #tpu.dot_dimension_numbers<[1], [0], [0], [1], [0, 0, 1, 1], [], []>, precision = #tpu.contract_precision<fp32>} : vector<1x64xf32>, vector<64x8xf32>, vector<1x8xf32> -> vector<1x8xf32>
    %c0_9 = arith.constant 0 : index
    %10 = memref.load %arg5[%c0_9] : memref<1xf32, #tpu.memory_space<smem>>
    %11 = vector.broadcast %10 : f32 to vector<1x8xf32>
    %12 = arith.addf %9, %11 : vector<1x8xf32>
    %cst_10 = arith.constant 0.000000e+00 : f32
    %13 = vector.broadcast %cst_10 : f32 to vector<1x8xf32>
    %14 = arith.subf %13, %12 : vector<1x8xf32>
    %15 = math.exp %14 : vector<1x8xf32>
    %cst_11 = arith.constant 1.000000e+00 : f32
    %16 = vector.broadcast %cst_11 : f32 to vector<1x8xf32>
    %17 = arith.addf %16, %15 : vector<1x8xf32>
    %cst_12 = arith.constant 1.000000e+00 : f32
    %18 = vector.broadcast %cst_12 : f32 to vector<1x8xf32>
    %19 = arith.divf %18, %17 : vector<1x8xf32>
    %c0_13 = arith.constant 0 : index
    %c0_14 = arith.constant 0 : index
    %c0_15 = arith.constant 0 : index
    %20 = vector.load %arg6[%c0_13, %c0_14, %c0_15] : memref<1x1x8xf32, #tpu.memory_space<vmem>>, vector<1x1x8xf32>
    %21 = vector.shape_cast %20 : vector<1x1x8xf32> to vector<1x8xf32>
    %22 = vector.shape_cast %19 : vector<1x8xf32> to vector<1x1x8xf32>
    tpu.vector_store %arg6[%c0_13, %c0_14, %c0_15], %22 {strides = array<i32>} : memref<1x1x8xf32, #tpu.memory_space<vmem>>, vector<1x1x8xf32>,
    return
  }
  func.func @transform_0(%arg0: i32) -> (i32, i32) {
    %c0_i32 = arith.constant 0 : i32
    %c0_i32_0 = arith.constant 0 : i32
    return %arg0, %c0_i32 : i32, i32
  }
  func.func @transform_1(%arg0: i32) -> (i32, i32) {
    %c0_i32 = arith.constant 0 : i32
    %c0_i32_0 = arith.constant 0 : i32
    %c0_i32_1 = arith.constant 0 : i32
    return %c0_i32, %c0_i32_0 : i32, i32
  }
  func.func @transform_2(%arg0: i32) -> (i32, i32) {
    %c0_i32 = arith.constant 0 : i32
    %c0_i32_0 = arith.constant 0 : i32
    %c0_i32_1 = arith.constant 0 : i32
    return %c0_i32, %c0_i32_0 : i32, i32
  }
  func.func @transform_3(%arg0: i32) -> (i32, i32) {
    %c0_i32 = arith.constant 0 : i32
    %c0_i32_0 = arith.constant 0 : i32
    %c0_i32_1 = arith.constant 0 : i32
    return %c0_i32, %c0_i32_0 : i32, i32
  }
  func.func @transform_4(%arg0: i32) -> i32 {
    %c0_i32 = arith.constant 0 : i32
    %c0_i32_0 = arith.constant 0 : i32
    return %c0_i32 : i32
  }
  func.func @transform_5(%arg0: i32) -> (i32, i32, i32) {
    %c0_i32 = arith.constant 0 : i32
    %c0_i32_0 = arith.constant 0 : i32
    %c0_i32_1 = arith.constant 0 : i32
    return %arg0, %c0_i32, %c0_i32_0 : i32, i32, i32
  }
}

</mosaic_0001>

<llo_original>
// kernel: tpu_custom_call.1
$region0: #{tpu_custom_call.1}
  #allocation0 [shape = 'u32[]', space=smem, size = 0x4, offset = 0x4, fixed_abs, tag = 'smem constant byte address 0x4 - core index']
  #allocation1 [shape = 'u32[72,128]{1,0:T(1,128)}', space=vmem, size = 0x9000, scoped, tag = 'internal scratch']
  #allocation2 [shape = 'f32[1]{0:T(128)S(6)}', space=smem, size = 0x200, scoped, tag = 'scoped memory for tpu_custom_call.1']
  %s0 = inlined_call_operand.vmem [shape: f32[8,32], index: 0, kind: input, shape index: {}]
  %s1 = inlined_call_operand.vmem [shape: f32[64,32], index: 1, kind: input, shape index: {}]
  %s2 = inlined_call_operand.vmem [shape: f32[64,1], index: 2, kind: input, shape index: {}]
  %s3 = inlined_call_operand.vmem [shape: f32[1,64], index: 3, kind: input, shape index: {}]
  %s4 = inlined_call_operand.<no memory space> [shape: f32[1], index: 4, kind: input, shape index: {}]
  %s5 = inlined_call_operand.hbm [shape: f32[1,1,8], index: 5, kind: output, shape index: {}]
  %s6 = sld [smem:[#allocation0]]
  $region30: #{tpu_custom_call.1} parent=0
    _
  %s8 = ssub.s32 1, %s6
  %s9 = scalar_select 0, %s8, %s6
  %10 = sst [smem:[#allocation2]] %s4
  $region1: #{tpu_custom_call.1} parent=0
    #allocation3 [shape = 'u8[512]{0}', space=vmem, size = 0x400, scoped, tag = 'output window, operand 0, single buffered']
    #allocation4 [shape = 's32[1]{0}', space=sflag, size = 0x4, scoped, tag = 'scoped memory for tpu_custom_call.1']
    %11 = vsyncpa [#allocation4], 0
    // Predicated region
    $region2: #{tpu_custom_call.1} parent=1 // pred_check
      _
    $region3: #{tpu_custom_call.1} parent=1 // pred_check_branch
      %13 = sbr.rel (0) target = $region5
    $region4: #{tpu_custom_call.1} parent=1 // pred_region
      _
    $region5: #{tpu_custom_call.1} parent=1 // pred_fallthru
      _
    // Predicated region
    $region6: #{tpu_custom_call.1} parent=1 // pred_check
      _
    $region7: #{tpu_custom_call.1} parent=1 // pred_check_branch
      %15 = sbr.rel (0) target = $region9
    $region8: #{tpu_custom_call.1} parent=1 // pred_region
      _
    $region9: #{tpu_custom_call.1} parent=1 // pred_fallthru
      _
    // Predicated region
    $region10: #{tpu_custom_call.1} parent=1 // pred_check
      _
    $region11: #{tpu_custom_call.1} parent=1 // pred_check_branch
      %17 = sbr.rel (0) target = $region13
    $region12: #{tpu_custom_call.1} parent=1 // pred_region
      _
    $region13: #{tpu_custom_call.1} parent=1 // pred_fallthru
      _
    // Predicated region
    $region14: #{tpu_custom_call.1} parent=1 // pred_check
      _
    $region15: #{tpu_custom_call.1} parent=1 // pred_check_branch
      %19 = sbr.rel (0) target = $region17
    $region16: #{tpu_custom_call.1} parent=1 // pred_region
      _
    $region17: #{tpu_custom_call.1} parent=1 // pred_fallthru
      _
    // Predicated region
    $region18: #{tpu_custom_call.1} parent=1 // pred_check
      _
    $region19: #{tpu_custom_call.1} parent=1 // pred_check_branch
      %21 = sbr.rel (0) target = $region21
    $region20: #{tpu_custom_call.1} parent=1 // pred_region
      _
    $region21: #{tpu_custom_call.1} parent=1 // pred_fallthru
      _
    %v22 = vld [vmem:[%s0] sm:$0xff]
    %v23 = vld [vmem:[%s1] sm:$0xff]
    %v24 = vld [vmem:[%s1 + $0x8] sm:$0xff]
    %v25 = vld [vmem:[%s1 + $0x10] sm:$0xff]
    %v26 = vld [vmem:[%s1 + $0x18] sm:$0xff]
    %v27 = vld [vmem:[%s1 + $0x20] sm:$0xff]
    %v28 = vld [vmem:[%s1 + $0x28] sm:$0xff]
    %v29 = vld [vmem:[%s1 + $0x30] sm:$0xff]
    %v30 = vld [vmem:[%s1 + $0x38] sm:$0xff]
    %v31 = vld [vmem:[%s2] sm:$0xff]
    %v32 = vld [vmem:[%s2 + $0x8] sm:$0xff]
    %v33 = vld [vmem:[%s2 + $0x10] sm:$0xff]
    %v34 = vld [vmem:[%s2 + $0x18] sm:$0xff]
    %v35 = vld [vmem:[%s2 + $0x20] sm:$0xff]
    %v36 = vld [vmem:[%s2 + $0x28] sm:$0xff]
    %v37 = vld [vmem:[%s2 + $0x30] sm:$0xff]
    %v38 = vld [vmem:[%s2 + $0x38] sm:$0xff]
    %40 = vset.pattern.permute.xlu0 0
    %41 = vperm.xlu0 %40, %v31
    %v42 = vpop.permute.xlu0 %41
    %45 = vset.pattern.permute.xlu0 0
    %46 = vperm.xlu0 %45, %v32
    %v47 = vpop.permute.xlu0 %46
    %50 = vset.pattern.permute.xlu0 0
    %51 = vperm.xlu0 %50, %v33
    %v52 = vpop.permute.xlu0 %51
    %55 = vset.pattern.permute.xlu0 0
    %56 = vperm.xlu0 %55, %v34
    %v57 = vpop.permute.xlu0 %56
    %60 = vset.pattern.permute.xlu0 0
    %61 = vperm.xlu0 %60, %v35
    %v62 = vpop.permute.xlu0 %61
    %65 = vset.pattern.permute.xlu0 0
    %66 = vperm.xlu0 %65, %v36
    %v67 = vpop.permute.xlu0 %66
    %70 = vset.pattern.permute.xlu0 0
    %71 = vperm.xlu0 %70, %v37
    %v72 = vpop.permute.xlu0 %71
    %75 = vset.pattern.permute.xlu0 0
    %76 = vperm.xlu0 %75, %v38
    %v77 = vpop.permute.xlu0 %76
    %vm79 = vcmask 261120
    %v81 = vsel %vm79, %v23, 0
    %v84 = vsel %vm79, %v24, 0
    %v87 = vsel %vm79, %v25, 0
    %v90 = vsel %vm79, %v26, 0
    %v93 = vsel %vm79, %v27, 0
    %v96 = vsel %vm79, %v28, 0
    %v99 = vsel %vm79, %v29, 0
    %v102 = vsel %vm79, %v30, 0
    %v105 = vsel %vm79, %v22, 0
    %107 = vmatpush.xpose.msra.mxu0 0.0
    %108 = vmatpush.xpose.msra.mxu0 0.0
    %109 = vmatpush.xpose.msra.mxu0 0.0
    %110 = vmatpush.xpose.msra.mxu0 0.0
    %111 = vmatpush.xpose.msra.mxu0 0.0
    %112 = vmatpush.xpose.msra.mxu0 0.0
    %113 = vmatpush.xpose.msra.mxu0 0.0
    %114 = vmatpush.xpose.msra.mxu0 0.0
    %115 = vmatpush.xpose.msra.mxu0 0.0
    %116 = vmatpush.xpose.msra.mxu0 0.0
    %117 = vmatpush.xpose.msra.mxu0 0.0
    %118 = vmatpush.xpose.msra.mxu0 0.0
    %119 = vmatpush.xpose.msra.mxu0 0.0
    %120 = vmatpush.xpose.msra.mxu0 0.0
    %121 = vmatpush.xpose.msra.mxu0 0.0
    %v122 = vand.u32 %v105, 4294901760
    %123 = vmatpush.xpose.msra.mxu0 %v122
    %v124 = vand.u32 %v81, 4294901760
    %v125 = vsub.f32 %v81, %v124
    %v126 = vand.u32 %v125, 4294901760
    %v127 = vsub.f32 %v125, %v126
    %v128 = vand.u32 %v127, 4294901760
    %129 = vmatmul.f32.gmra.mxu0 %v128
    %v130 = vpop.f32.mrf.mxu0
    %v131 = vadd.f32 %v42, %v130
    %v132 = vand.u32 %v84, 4294901760
    %v133 = vsub.f32 %v84, %v132
    %v134 = vand.u32 %v133, 4294901760
    %v135 = vsub.f32 %v133, %v134
    %v136 = vand.u32 %v135, 4294901760
    %137 = vmatmul.f32.gmra.mxu0 %v136
    %v138 = vpop.f32.mrf.mxu0
    %v139 = vadd.f32 %v47, %v138
    %v140 = vand.u32 %v87, 4294901760
    %v141 = vsub.f32 %v87, %v140
    %v142 = vand.u32 %v141, 4294901760
    %v143 = vsub.f32 %v141, %v142
    %v144 = vand.u32 %v143, 4294901760
    %145 = vmatmul.f32.gmra.mxu0 %v144
    %v146 = vpop.f32.mrf.mxu0
    %v147 = vadd.f32 %v52, %v146
    %v148 = vand.u32 %v90, 4294901760
    %v149 = vsub.f32 %v90, %v148
    %v150 = vand.u32 %v149, 4294901760
    %v151 = vsub.f32 %v149, %v150
    %v152 = vand.u32 %v151, 4294901760
    %153 = vmatmul.f32.gmra.mxu0 %v152
    %v154 = vpop.f32.mrf.mxu0
    %v155 = vadd.f32 %v57, %v154
    %v156 = vand.u32 %v93, 4294901760
    %v157 = vsub.f32 %v93, %v156
    %v158 = vand.u32 %v157, 4294901760
    %v159 = vsub.f32 %v157, %v158
    %v160 = vand.u32 %v159, 4294901760
    %161 = vmatmul.f32.gmra.mxu0 %v160
    %v162 = vpop.f32.mrf.mxu0
    %v163 = vadd.f32 %v62, %v162
    %v164 = vand.u32 %v96, 4294901760
    %v165 = vsub.f32 %v96, %v164
    %v166 = vand.u32 %v165, 4294901760
    %v167 = vsub.f32 %v165, %v166
    %v168 = vand.u32 %v167, 4294901760
    %169 = vmatmul.f32.gmra.mxu0 %v168
    %v170 = vpop.f32.mrf.mxu0
    %v171 = vadd.f32 %v67, %v170
    %v172 = vand.u32 %v99, 4294901760
    %v173 = vsub.f32 %v99, %v172
    %v174 = vand.u32 %v173, 4294901760
    %v175 = vsub.f32 %v173, %v174
    %v176 = vand.u32 %v175, 4294901760
    %177 = vmatmul.f32.gmra.mxu0 %v176
    %v178 = vpop.f32.mrf.mxu0
    %v179 = vadd.f32 %v72, %v178
    %v180 = vand.u32 %v102, 4294901760
    %v181 = vsub.f32 %v102, %v180
    %v182 = vand.u32 %v181, 4294901760
    %v183 = vsub.f32 %v181, %v182
    %v184 = vand.u32 %v183, 4294901760
    %185 = vmatmul.f32.gmra.mxu0 %v184
    %v186 = vpop.f32.mrf.mxu0
    %v187 = vadd.f32 %v77, %v186
    %188 = vdwg.mxu0
    %189 = vmatpush.xpose.msra.mxu0 0.0
    %190 = vmatpush.xpose.msra.mxu0 0.0
    %191 = vmatpush.xpose.msra.mxu0 0.0
    %192 = vmatpush.xpose.msra.mxu0 0.0
    %193 = vmatpush.xpose.msra.mxu0 0.0
    %194 = vmatpush.xpose.msra.mxu0 0.0
    %195 = vmatpush.xpose.msra.mxu0 0.0
    %196 = vmatpush.xpose.msra.mxu0 0.0
    %197 = vmatpush.xpose.msra.mxu0 0.0
    %198 = vmatpush.xpose.msra.mxu0 0.0
    %199 = vmatpush.xpose.msra.mxu0 0.0
    %200 = vmatpush.xpose.msra.mxu0 0.0
    %201 = vmatpush.xpose.msra.mxu0 0.0
    %202 = vmatpush.xpose.msra.mxu0 0.0
    %203 = vmatpush.xpose.msra.mxu0 0.0
    %v204 = vand.u32 %v105, 4294901760
    %v205 = vsub.f32 %v105, %v204
    %v206 = vand.u32 %v205, 4294901760
    %v207 = vsub.f32 %v205, %v206
    %v208 = vand.u32 %v207, 4294901760
    %209 = vmatpush.xpose.msra.mxu0 %v208
    %v210 = vand.u32 %v81, 4294901760
    %211 = vmatmul.f32.gmra.mxu0 %v210
    %v212 = vpop.f32.mrf.mxu0
    %v213 = vadd.f32 %v131, %v212
    %v214 = vand.u32 %v84, 4294901760
    %215 = vmatmul.f32.gmra.mxu0 %v214
    %v216 = vpop.f32.mrf.mxu0
    %v217 = vadd.f32 %v139, %v216
    %v218 = vand.u32 %v87, 4294901760
    %219 = vmatmul.f32.gmra.mxu0 %v218
    %v220 = vpop.f32.mrf.mxu0
    %v221 = vadd.f32 %v147, %v220
    %v222 = vand.u32 %v90, 4294901760
    %223 = vmatmul.f32.gmra.mxu0 %v222
    %v224 = vpop.f32.mrf.mxu0
    %v225 = vadd.f32 %v155, %v224
    %v226 = vand.u32 %v93, 4294901760
    %227 = vmatmul.f32.gmra.mxu0 %v226
    %v228 = vpop.f32.mrf.mxu0
    %v229 = vadd.f32 %v163, %v228
    %v230 = vand.u32 %v96, 4294901760
    %231 = vmatmul.f32.gmra.mxu0 %v230
    %v232 = vpop.f32.mrf.mxu0
    %v233 = vadd.f32 %v171, %v232
    %v234 = vand.u32 %v99, 4294901760
    %235 = vmatmul.f32.gmra.mxu0 %v234
    %v236 = vpop.f32.mrf.mxu0
    %v237 = vadd.f32 %v179, %v236
    %v238 = vand.u32 %v102, 4294901760
    %239 = vmatmul.f32.gmra.mxu0 %v238
    %v240 = vpop.f32.mrf.mxu0
    %v241 = vadd.f32 %v187, %v240
    %242 = vdwg.mxu0
    %243 = vmatpush.xpose.msra.mxu0 0.0
    %244 = vmatpush.xpose.msra.mxu0 0.0
    %245 = vmatpush.xpose.msra.mxu0 0.0
    %246 = vmatpush.xpose.msra.mxu0 0.0
    %247 = vmatpush.xpose.msra.mxu0 0.0
    %248 = vmatpush.xpose.msra.mxu0 0.0
    %249 = vmatpush.xpose.msra.mxu0 0.0
    %250 = vmatpush.xpose.msra.mxu0 0.0
    %251 = vmatpush.xpose.msra.mxu0 0.0
    %252 = vmatpush.xpose.msra.mxu0 0.0
    %253 = vmatpush.xpose.msra.mxu0 0.0
    %254 = vmatpush.xpose.msra.mxu0 0.0
    %255 = vmatpush.xpose.msra.mxu0 0.0
    %256 = vmatpush.xpose.msra.mxu0 0.0
    %257 = vmatpush.xpose.msra.mxu0 0.0
    %v258 = vand.u32 %v105, 4294901760
    %v259 = vsub.f32 %v105, %v258
    %260 = vmatpush.xpose.msra.mxu0 %v259
    %v261 = vand.u32 %v81, 4294901760
    %v262 = vsub.f32 %v81, %v261
    %263 = vmatmul.f32.gmra.mxu0 %v262
    %v264 = vpop.f32.mrf.mxu0
    %v265 = vadd.f32 %v213, %v264
    %v266 = vand.u32 %v84, 4294901760
    %v267 = vsub.f32 %v84, %v266
    %268 = vmatmul.f32.gmra.mxu0 %v267
    %v269 = vpop.f32.mrf.mxu0
    %v270 = vadd.f32 %v217, %v269
    %v271 = vand.u32 %v87, 4294901760
    %v272 = vsub.f32 %v87, %v271
    %273 = vmatmul.f32.gmra.mxu0 %v272
    %v274 = vpop.f32.mrf.mxu0
    %v275 = vadd.f32 %v221, %v274
    %v276 = vand.u32 %v90, 4294901760
    %v277 = vsub.f32 %v90, %v276
    %278 = vmatmul.f32.gmra.mxu0 %v277
    %v279 = vpop.f32.mrf.mxu0
    %v280 = vadd.f32 %v225, %v279
    %v281 = vand.u32 %v93, 4294901760
    %v282 = vsub.f32 %v93, %v281
    %283 = vmatmul.f32.gmra.mxu0 %v282
    %v284 = vpop.f32.mrf.mxu0
    %v285 = vadd.f32 %v229, %v284
    %v286 = vand.u32 %v96, 4294901760
    %v287 = vsub.f32 %v96, %v286
    %288 = vmatmul.f32.gmra.mxu0 %v287
    %v289 = vpop.f32.mrf.mxu0
    %v290 = vadd.f32 %v233, %v289
    %v291 = vand.u32 %v99, 4294901760
    %v292 = vsub.f32 %v99, %v291
    %293 = vmatmul.f32.gmra.mxu0 %v292
    %v294 = vpop.f32.mrf.mxu0
    %v295 = vadd.f32 %v237, %v294
    %v296 = vand.u32 %v102, 4294901760
    %v297 = vsub.f32 %v102, %v296
    %298 = vmatmul.f32.gmra.mxu0 %v297
    %v299 = vpop.f32.mrf.mxu0
    %v300 = vadd.f32 %v241, %v299
    %301 = vdwg.mxu0
    %302 = vmatpush.xpose.msra.mxu0 0.0
    %303 = vmatpush.xpose.msra.mxu0 0.0
    %304 = vmatpush.xpose.msra.mxu0 0.0
    %305 = vmatpush.xpose.msra.mxu0 0.0
    %306 = vmatpush.xpose.msra.mxu0 0.0
    %307 = vmatpush.xpose.msra.mxu0 0.0
    %308 = vmatpush.xpose.msra.mxu0 0.0
    %309 = vmatpush.xpose.msra.mxu0 0.0
    %310 = vmatpush.xpose.msra.mxu0 0.0
    %311 = vmatpush.xpose.msra.mxu0 0.0
    %312 = vmatpush.xpose.msra.mxu0 0.0
    %313 = vmatpush.xpose.msra.mxu0 0.0
    %314 = vmatpush.xpose.msra.mxu0 0.0
    %315 = vmatpush.xpose.msra.mxu0 0.0
    %316 = vmatpush.xpose.msra.mxu0 0.0
    %v317 = vand.u32 %v105, 4294901760
    %318 = vmatpush.xpose.msra.mxu0 %v317
    %v319 = vand.u32 %v81, 4294901760
    %v320 = vsub.f32 %v81, %v319
    %v321 = vand.u32 %v320, 4294901760
    %322 = vmatmul.f32.gmra.mxu0 %v321
    %v323 = vpop.f32.mrf.mxu0
    %v324 = vadd.f32 %v265, %v323
    %v325 = vand.u32 %v84, 4294901760
    %v326 = vsub.f32 %v84, %v325
    %v327 = vand.u32 %v326, 4294901760
    %328 = vmatmul.f32.gmra.mxu0 %v327
    %v329 = vpop.f32.mrf.mxu0
    %v330 = vadd.f32 %v270, %v329
    %v331 = vand.u32 %v87, 4294901760
    %v332 = vsub.f32 %v87, %v331
    %v333 = vand.u32 %v332, 4294901760
    %334 = vmatmul.f32.gmra.mxu0 %v333
    %v335 = vpop.f32.mrf.mxu0
    %v336 = vadd.f32 %v275, %v335
    %v337 = vand.u32 %v90, 4294901760
    %v338 = vsub.f32 %v90, %v337
    %v339 = vand.u32 %v338, 4294901760
    %340 = vmatmul.f32.gmra.mxu0 %v339
    %v341 = vpop.f32.mrf.mxu0
    %v342 = vadd.f32 %v280, %v341
    %v343 = vand.u32 %v93, 4294901760
    %v344 = vsub.f32 %v93, %v343
    %v345 = vand.u32 %v344, 4294901760
    %346 = vmatmul.f32.gmra.mxu0 %v345
    %v347 = vpop.f32.mrf.mxu0
    %v348 = vadd.f32 %v285, %v347
    %v349 = vand.u32 %v96, 4294901760
    %v350 = vsub.f32 %v96, %v349
    %v351 = vand.u32 %v350, 4294901760
    %352 = vmatmul.f32.gmra.mxu0 %v351
    %v353 = vpop.f32.mrf.mxu0
    %v354 = vadd.f32 %v290, %v353
    %v355 = vand.u32 %v99, 4294901760
    %v356 = vsub.f32 %v99, %v355
    %v357 = vand.u32 %v356, 4294901760
    %358 = vmatmul.f32.gmra.mxu0 %v357
    %v359 = vpop.f32.mrf.mxu0
    %v360 = vadd.f32 %v295, %v359
    %v361 = vand.u32 %v102, 4294901760
    %v362 = vsub.f32 %v102, %v361
    %v363 = vand.u32 %v362, 4294901760
    %364 = vmatmul.f32.gmra.mxu0 %v363
    %v365 = vpop.f32.mrf.mxu0
    %v366 = vadd.f32 %v300, %v365
    %367 = vdwg.mxu0
    %368 = vmatpush.xpose.msra.mxu0 0.0
    %369 = vmatpush.xpose.msra.mxu0 0.0
    %370 = vmatpush.xpose.msra.mxu0 0.0
    %371 = vmatpush.xpose.msra.mxu0 0.0
    %372 = vmatpush.xpose.msra.mxu0 0.0
    %373 = vmatpush.xpose.msra.mxu0 0.0
    %374 = vmatpush.xpose.msra.mxu0 0.0
    %375 = vmatpush.xpose.msra.mxu0 0.0
    %376 = vmatpush.xpose.msra.mxu0 0.0
    %377 = vmatpush.xpose.msra.mxu0 0.0
    %378 = vmatpush.xpose.msra.mxu0 0.0
    %379 = vmatpush.xpose.msra.mxu0 0.0
    %380 = vmatpush.xpose.msra.mxu0 0.0
    %381 = vmatpush.xpose.msra.mxu0 0.0
    %382 = vmatpush.xpose.msra.mxu0 0.0
    %v383 = vand.u32 %v105, 4294901760
    %v384 = vsub.f32 %v105, %v383
    %v385 = vand.u32 %v384, 4294901760
    %386 = vmatpush.xpose.msra.mxu0 %v385
    %v387 = vand.u32 %v81, 4294901760
    %388 = vmatmul.f32.gmra.mxu0 %v387
    %v389 = vpop.f32.mrf.mxu0
    %v390 = vadd.f32 %v324, %v389
    %v391 = vand.u32 %v84, 4294901760
    %392 = vmatmul.f32.gmra.mxu0 %v391
    %v393 = vpop.f32.mrf.mxu0
    %v394 = vadd.f32 %v330, %v393
    %v395 = vand.u32 %v87, 4294901760
    %396 = vmatmul.f32.gmra.mxu0 %v395
    %v397 = vpop.f32.mrf.mxu0
    %v398 = vadd.f32 %v336, %v397
    %v399 = vand.u32 %v90, 4294901760
    %400 = vmatmul.f32.gmra.mxu0 %v399
    %v401 = vpop.f32.mrf.mxu0
    %v402 = vadd.f32 %v342, %v401
    %v403 = vand.u32 %v93, 4294901760
    %404 = vmatmul.f32.gmra.mxu0 %v403
    %v405 = vpop.f32.mrf.mxu0
    %v406 = vadd.f32 %v348, %v405
    %v407 = vand.u32 %v96, 4294901760
    %408 = vmatmul.f32.gmra.mxu0 %v407
    %v409 = vpop.f32.mrf.mxu0
    %v410 = vadd.f32 %v354, %v409
    %v411 = vand.u32 %v99, 4294901760
    %412 = vmatmul.f32.gmra.mxu0 %v411
    %v413 = vpop.f32.mrf.mxu0
    %v414 = vadd.f32 %v360, %v413
    %v415 = vand.u32 %v102, 4294901760
    %416 = vmatmul.f32.gmra.mxu0 %v415
    %v417 = vpop.f32.mrf.mxu0
    %v418 = vadd.f32 %v366, %v417
    %419 = vdwg.mxu0
    %420 = vmatpush.xpose.msra.mxu0 0.0
    %421 = vmatpush.xpose.msra.mxu0 0.0
    %422 = vmatpush.xpose.msra.mxu0 0.0
    %423 = vmatpush.xpose.msra.mxu0 0.0
    %424 = vmatpush.xpose.msra.mxu0 0.0
    %425 = vmatpush.xpose.msra.mxu0 0.0
    %426 = vmatpush.xpose.msra.mxu0 0.0
    %427 = vmatpush.xpose.msra.mxu0 0.0
    %428 = vmatpush.xpose.msra.mxu0 0.0
    %429 = vmatpush.xpose.msra.mxu0 0.0
    %430 = vmatpush.xpose.msra.mxu0 0.0
    %431 = vmatpush.xpose.msra.mxu0 0.0
    %432 = vmatpush.xpose.msra.mxu0 0.0
    %433 = vmatpush.xpose.msra.mxu0 0.0
    %434 = vmatpush.xpose.msra.mxu0 0.0
    %v435 = vand.u32 %v105, 4294901760
    %436 = vmatpush.xpose.msra.mxu0 %v435
    %v437 = vand.u32 %v81, 4294901760
    %438 = vmatmul.f32.gmra.mxu0 %v437
    %v439 = vpop.f32.mrf.mxu0
    %v440 = vadd.f32 %v390, %v439
    %v441 = vand.u32 %v84, 4294901760
    %442 = vmatmul.f32.gmra.mxu0 %v441
    %v443 = vpop.f32.mrf.mxu0
    %v444 = vadd.f32 %v394, %v443
    %v445 = vand.u32 %v87, 4294901760
    %446 = vmatmul.f32.gmra.mxu0 %v445
    %v447 = vpop.f32.mrf.mxu0
    %v448 = vadd.f32 %v398, %v447
    %v449 = vand.u32 %v90, 4294901760
    %450 = vmatmul.f32.gmra.mxu0 %v449
    %v451 = vpop.f32.mrf.mxu0
    %v452 = vadd.f32 %v402, %v451
    %v453 = vand.u32 %v93, 4294901760
    %454 = vmatmul.f32.gmra.mxu0 %v453
    %v455 = vpop.f32.mrf.mxu0
    %v456 = vadd.f32 %v406, %v455
    %v457 = vand.u32 %v96, 4294901760
    %458 = vmatmul.f32.gmra.mxu0 %v457
    %v459 = vpop.f32.mrf.mxu0
    %v460 = vadd.f32 %v410, %v459
    %v461 = vand.u32 %v99, 4294901760
    %462 = vmatmul.f32.gmra.mxu0 %v461
    %v463 = vpop.f32.mrf.mxu0
    %v464 = vadd.f32 %v414, %v463
    %v465 = vand.u32 %v102, 4294901760
    %466 = vmatmul.f32.gmra.mxu0 %v465
    %v467 = vpop.f32.mrf.mxu0
    %v468 = vadd.f32 %v418, %v467
    %469 = vdwg.mxu0
    %v470 = vmax.f32 %v440, 0.0
    %v471 = vmax.f32 %v444, 0.0
    %v472 = vmax.f32 %v448, 0.0
    %v473 = vmax.f32 %v452, 0.0
    %v474 = vmax.f32 %v456, 0.0
    %v475 = vmax.f32 %v460, 0.0
    %v476 = vmax.f32 %v464, 0.0
    %v477 = vmax.f32 %v468, 0.0
    %v478 = vld [vmem:[%s3] sm:$0x1]
    %s479 = sld [smem:[#allocation2]]
    %v480 = vstv %s479
    %vm481 = vcmask 523264
    %v483 = vsel %vm481, %v478, 0
    %485 = vmatpush.msra.mxu0 0.0
    %486 = vmatpush.msra.mxu0 0.0
    %487 = vmatpush.msra.mxu0 0.0
    %488 = vmatpush.msra.mxu0 0.0
    %489 = vmatpush.msra.mxu0 0.0
    %490 = vmatpush.msra.mxu0 0.0
    %491 = vmatpush.msra.mxu0 0.0
    %492 = vmatpush.msra.mxu0 0.0
    %v493 = vand.u32 %v477, 4294901760
    %494 = vmatpush.msra.mxu0 %v493
    %v495 = vand.u32 %v476, 4294901760
    %496 = vmatpush.msra.mxu0 %v495
    %v497 = vand.u32 %v475, 4294901760
    %498 = vmatpush.msra.mxu0 %v497
    %v499 = vand.u32 %v474, 4294901760
    %500 = vmatpush.msra.mxu0 %v499
    %v501 = vand.u32 %v473, 4294901760
    %502 = vmatpush.msra.mxu0 %v501
    %v503 = vand.u32 %v472, 4294901760
    %504 = vmatpush.msra.mxu0 %v503
    %v505 = vand.u32 %v471, 4294901760
    %506 = vmatpush.msra.mxu0 %v505
    %v507 = vand.u32 %v470, 4294901760
    %508 = vmatpush.msra.mxu0 %v507
    %v509 = vand.u32 %v483, 4294901760
    %v510 = vsub.f32 %v483, %v509
    %v511 = vand.u32 %v510, 4294901760
    %v512 = vsub.f32 %v510, %v511
    %v513 = vand.u32 %v512, 4294901760
    %514 = vmatmul.f32.gmra.mxu0 %v513
    %v515 = vpop.f32.mrf.mxu0
    %v516 = vadd.f32 %v480, %v515
    %517 = vdwg.mxu0
    %518 = vmatpush.msra.mxu0 0.0
    %519 = vmatpush.msra.mxu0 0.0
    %520 = vmatpush.msra.mxu0 0.0
    %521 = vmatpush.msra.mxu0 0.0
    %522 = vmatpush.msra.mxu0 0.0
    %523 = vmatpush.msra.mxu0 0.0
    %524 = vmatpush.msra.mxu0 0.0
    %525 = vmatpush.msra.mxu0 0.0
    %v526 = vand.u32 %v477, 4294901760
    %v527 = vsub.f32 %v477, %v526
    %v528 = vand.u32 %v527, 4294901760
    %v529 = vsub.f32 %v527, %v528
    %v530 = vand.u32 %v529, 4294901760
    %531 = vmatpush.msra.mxu0 %v530
    %v532 = vand.u32 %v476, 4294901760
    %v533 = vsub.f32 %v476, %v532
    %v534 = vand.u32 %v533, 4294901760
    %v535 = vsub.f32 %v533, %v534
    %v536 = vand.u32 %v535, 4294901760
    %537 = vmatpush.msra.mxu0 %v536
    %v538 = vand.u32 %v475, 4294901760
    %v539 = vsub.f32 %v475, %v538
    %v540 = vand.u32 %v539, 4294901760
    %v541 = vsub.f32 %v539, %v540
    %v542 = vand.u32 %v541, 4294901760
    %543 = vmatpush.msra.mxu0 %v542
    %v544 = vand.u32 %v474, 4294901760
    %v545 = vsub.f32 %v474, %v544
    %v546 = vand.u32 %v545, 4294901760
    %v547 = vsub.f32 %v545, %v546
    %v548 = vand.u32 %v547, 4294901760
    %549 = vmatpush.msra.mxu0 %v548
    %v550 = vand.u32 %v473, 4294901760
    %v551 = vsub.f32 %v473, %v550
    %v552 = vand.u32 %v551, 4294901760
    %v553 = vsub.f32 %v551, %v552
    %v554 = vand.u32 %v553, 4294901760
    %555 = vmatpush.msra.mxu0 %v554
    %v556 = vand.u32 %v472, 4294901760
    %v557 = vsub.f32 %v472, %v556
    %v558 = vand.u32 %v557, 4294901760
    %v559 = vsub.f32 %v557, %v558
    %v560 = vand.u32 %v559, 4294901760
    %561 = vmatpush.msra.mxu0 %v560
    %v562 = vand.u32 %v471, 4294901760
    %v563 = vsub.f32 %v471, %v562
    %v564 = vand.u32 %v563, 4294901760
    %v565 = vsub.f32 %v563, %v564
    %v566 = vand.u32 %v565, 4294901760
    %567 = vmatpush.msra.mxu0 %v566
    %v568 = vand.u32 %v470, 4294901760
    %v569 = vsub.f32 %v470, %v568
    %v570 = vand.u32 %v569, 4294901760
    %v571 = vsub.f32 %v569, %v570
    %v572 = vand.u32 %v571, 4294901760
    %573 = vmatpush.msra.mxu0 %v572
    %v574 = vand.u32 %v483, 4294901760
    %575 = vmatmul.f32.gmra.mxu0 %v574
    %v576 = vpop.f32.mrf.mxu0
    %v577 = vadd.f32 %v516, %v576
    %578 = vdwg.mxu0
    %579 = vmatpush.msra.mxu0 0.0
    %580 = vmatpush.msra.mxu0 0.0
    %581 = vmatpush.msra.mxu0 0.0
    %582 = vmatpush.msra.mxu0 0.0
    %583 = vmatpush.msra.mxu0 0.0
    %584 = vmatpush.msra.mxu0 0.0
    %585 = vmatpush.msra.mxu0 0.0
    %586 = vmatpush.msra.mxu0 0.0
    %v587 = vand.u32 %v477, 4294901760
    %v588 = vsub.f32 %v477, %v587
    %589 = vmatpush.msra.mxu0 %v588
    %v590 = vand.u32 %v476, 4294901760
    %v591 = vsub.f32 %v476, %v590
    %592 = vmatpush.msra.mxu0 %v591
    %v593 = vand.u32 %v475, 4294901760
    %v594 = vsub.f32 %v475, %v593
    %595 = vmatpush.msra.mxu0 %v594
    %v596 = vand.u32 %v474, 4294901760
    %v597 = vsub.f32 %v474, %v596
    %598 = vmatpush.msra.mxu0 %v597
    %v599 = vand.u32 %v473, 4294901760
    %v600 = vsub.f32 %v473, %v599
    %601 = vmatpush.msra.mxu0 %v600
    %v602 = vand.u32 %v472, 4294901760
    %v603 = vsub.f32 %v472, %v602
    %604 = vmatpush.msra.mxu0 %v603
    %v605 = vand.u32 %v471, 4294901760
    %v606 = vsub.f32 %v471, %v605
    %607 = vmatpush.msra.mxu0 %v606
    %v608 = vand.u32 %v470, 4294901760
    %v609 = vsub.f32 %v470, %v608
    %610 = vmatpush.msra.mxu0 %v609
    %v611 = vand.u32 %v483, 4294901760
    %v612 = vsub.f32 %v483, %v611
    %613 = vmatmul.f32.gmra.mxu0 %v612
    %v614 = vpop.f32.mrf.mxu0
    %v615 = vadd.f32 %v577, %v614
    %616 = vdwg.mxu0
    %617 = vmatpush.msra.mxu0 0.0
    %618 = vmatpush.msra.mxu0 0.0
    %619 = vmatpush.msra.mxu0 0.0
    %620 = vmatpush.msra.mxu0 0.0
    %621 = vmatpush.msra.mxu0 0.0
    %622 = vmatpush.msra.mxu0 0.0
    %623 = vmatpush.msra.mxu0 0.0
    %624 = vmatpush.msra.mxu0 0.0
    %v625 = vand.u32 %v477, 4294901760
    %626 = vmatpush.msra.mxu0 %v625
    %v627 = vand.u32 %v476, 4294901760
    %628 = vmatpush.msra.mxu0 %v627
    %v629 = vand.u32 %v475, 4294901760
    %630 = vmatpush.msra.mxu0 %v629
    %v631 = vand.u32 %v474, 4294901760
    %632 = vmatpush.msra.mxu0 %v631
    %v633 = vand.u32 %v473, 4294901760
    %634 = vmatpush.msra.mxu0 %v633
    %v635 = vand.u32 %v472, 4294901760
    %636 = vmatpush.msra.mxu0 %v635
    %v637 = vand.u32 %v471, 4294901760
    %638 = vmatpush.msra.mxu0 %v637
    %v639 = vand.u32 %v470, 4294901760
    %640 = vmatpush.msra.mxu0 %v639
    %v641 = vand.u32 %v483, 4294901760
    %v642 = vsub.f32 %v483, %v641
    %v643 = vand.u32 %v642, 4294901760
    %644 = vmatmul.f32.gmra.mxu0 %v643
    %v645 = vpop.f32.mrf.mxu0
    %v646 = vadd.f32 %v615, %v645
    %647 = vdwg.mxu0
    %648 = vmatpush.msra.mxu0 0.0
    %649 = vmatpush.msra.mxu0 0.0
    %650 = vmatpush.msra.mxu0 0.0
    %651 = vmatpush.msra.mxu0 0.0
    %652 = vmatpush.msra.mxu0 0.0
    %653 = vmatpush.msra.mxu0 0.0
    %654 = vmatpush.msra.mxu0 0.0
    %655 = vmatpush.msra.mxu0 0.0
    %v656 = vand.u32 %v477, 4294901760
    %v657 = vsub.f32 %v477, %v656
    %v658 = vand.u32 %v657, 4294901760
    %659 = vmatpush.msra.mxu0 %v658
    %v660 = vand.u32 %v476, 4294901760
    %v661 = vsub.f32 %v476, %v660
    %v662 = vand.u32 %v661, 4294901760
    %663 = vmatpush.msra.mxu0 %v662
    %v664 = vand.u32 %v475, 4294901760
    %v665 = vsub.f32 %v475, %v664
    %v666 = vand.u32 %v665, 4294901760
    %667 = vmatpush.msra.mxu0 %v666
    %v668 = vand.u32 %v474, 4294901760
    %v669 = vsub.f32 %v474, %v668
    %v670 = vand.u32 %v669, 4294901760
    %671 = vmatpush.msra.mxu0 %v670
    %v672 = vand.u32 %v473, 4294901760
    %v673 = vsub.f32 %v473, %v672
    %v674 = vand.u32 %v673, 4294901760
    %675 = vmatpush.msra.mxu0 %v674
    %v676 = vand.u32 %v472, 4294901760
    %v677 = vsub.f32 %v472, %v676
    %v678 = vand.u32 %v677, 4294901760
    %679 = vmatpush.msra.mxu0 %v678
    %v680 = vand.u32 %v471, 4294901760
    %v681 = vsub.f32 %v471, %v680
    %v682 = vand.u32 %v681, 4294901760
    %683 = vmatpush.msra.mxu0 %v682
    %v684 = vand.u32 %v470, 4294901760
    %v685 = vsub.f32 %v470, %v684
    %v686 = vand.u32 %v685, 4294901760
    %687 = vmatpush.msra.mxu0 %v686
    %v688 = vand.u32 %v483, 4294901760
    %689 = vmatmul.f32.gmra.mxu0 %v688
    %v690 = vpop.f32.mrf.mxu0
    %v691 = vadd.f32 %v646, %v690
    %692 = vdwg.mxu0
    %693 = vmatpush.msra.mxu0 0.0
    %694 = vmatpush.msra.mxu0 0.0
    %695 = vmatpush.msra.mxu0 0.0
    %696 = vmatpush.msra.mxu0 0.0
    %697 = vmatpush.msra.mxu0 0.0
    %698 = vmatpush.msra.mxu0 0.0
    %699 = vmatpush.msra.mxu0 0.0
    %700 = vmatpush.msra.mxu0 0.0
    %v701 = vand.u32 %v477, 4294901760
    %702 = vmatpush.msra.mxu0 %v701
    %v703 = vand.u32 %v476, 4294901760
    %704 = vmatpush.msra.mxu0 %v703
    %v705 = vand.u32 %v475, 4294901760
    %706 = vmatpush.msra.mxu0 %v705
    %v707 = vand.u32 %v474, 4294901760
    %708 = vmatpush.msra.mxu0 %v707
    %v709 = vand.u32 %v473, 4294901760
    %710 = vmatpush.msra.mxu0 %v709
    %v711 = vand.u32 %v472, 4294901760
    %712 = vmatpush.msra.mxu0 %v711
    %v713 = vand.u32 %v471, 4294901760
    %714 = vmatpush.msra.mxu0 %v713
    %v715 = vand.u32 %v470, 4294901760
    %716 = vmatpush.msra.mxu0 %v715
    %v717 = vand.u32 %v483, 4294901760
    %718 = vmatmul.f32.gmra.mxu0 %v717
    %v719 = vpop.f32.mrf.mxu0
    %v720 = vadd.f32 %v691, %v719
    %721 = vdwg.mxu0
    %v722 = vsub.f32 0.0, %v720
    %v723 = vmul.f32 %v722, 1.442695
    %v724 = vpow.pop %v723
    %v725 = vadd.f32 %v724, 1.0
    %v726 = vrcp.pop %v725
    %v727 = vmul.f32 %v725, %v726
    %v728 = vsub.f32 1.0, %v727
    %v729 = vmul.f32 %v726, %v728
    %v730 = vadd.f32 %v726, %v729
    %vm731 = vweird.f32 %v725
    %vm732 = vweird.f32 %v726
    %vm733 = vmor %vm731, %vm732
    %v734 = vsel %vm733, %v726, %v730
    %v735 = vand.u32 2147483647, %v725
    %vm736 = vcmp.eq.f32.partialorder %v735, 8.507059e+37
    %v737 = vand.u32 %v725, 2147483648
    %v738 = vor.u32 1.1754944e-38, %v737
    %v739 = vsel %vm736, %v738, %v734
    %v740 = vmul.f32 1.0, %v739
    %vm741 = vcmask 57344
    %742 = vst.msk [vmem:[#allocation3] sm:$0x1] %vm741, %v740
    // Predicated region
    $region22: #{tpu_custom_call.1} parent=1 // pred_check
      _
    $region23: #{tpu_custom_call.1} parent=1 // pred_check_branch
      %744 = sbr.rel (0) target = $region25
    $region24: #{tpu_custom_call.1} parent=1 // pred_region
      %746 = vsyncadd [#allocation4], 0
      %s748 = sshll.u32 [#allocation3], 4
      %s749 = int_to_ptr.vmem [resolvable:$true] %s748
      %s750 = sshll.u32 %s5, 4
      %s751 = int_to_ptr.hbm [resolvable:$true] %s750
      %753 = dma.vmem_to_hbm [thread:$0]  %s749, 16, %s751, [#allocation4]
    $region25: #{tpu_custom_call.1} parent=1 // pred_fallthru
      _
    // Predicated region
    $region26: #{tpu_custom_call.1} parent=1 // pred_check
      _
    $region27: #{tpu_custom_call.1} parent=1 // pred_check_branch
      %755 = sbr.rel (0) target = $region29
    $region28: #{tpu_custom_call.1} parent=1 // pred_region
      %757 = dma.done [#allocation4], 16
    $region29: #{tpu_custom_call.1} parent=1 // pred_fallthru
      _
    %758 = vsyncpa [#allocation4], 1

</llo_original>
